<compile_context>
chip_gen: v5e
topology: v5e:2x2
jax: 0.10.0
libtpu: 0.0.40
codegen_flags: <defaults>
</compile_context>

<pallas_src>
import jax
import jax.numpy as jnp
from jax.experimental import pallas as pl
from jax.experimental.pallas import tpu as pltpu

_LANES = 128          # vreg lane width (last dim)
_SUBLANES = 8         # vreg sublane count (second-to-last dim)
_MIN_SPLIT_ROWS = 1024  # only force a 2-way split (for v7x megacore) above this many rows


def _scale_kernel(sub_ref, x_ref, o_ref):
    # Single VPU multiply over the whole tile; scalar scale comes from SMEM.
    # astype keeps the store dtype equal to the output dtype (e.g. bf16 inputs).
    o_ref[...] = (x_ref[...] * sub_ref[0, 0]).astype(o_ref.dtype)


def _round_up(v, m):
    return pl.cdiv(v, m) * m


def identity_forward(x, sub=1.0, *, target_block_bytes=2 * 1024 * 1024):
    """Pallas implementation of Identity.forward: returns x * sub (same shape/dtype)."""
    # Identity fast path: skip the kernel entirely (removes the whole read+write pass).
    if isinstance(sub, (int, float)) and float(sub) == 1.0:
        return x

    orig_shape = x.shape
    orig_dtype = x.dtype
    n = x.size
    if n == 0:
        return x

    itemsize = x.dtype.itemsize
    rows = pl.cdiv(n, _LANES)

    # Row tile targeting ~2 MiB blocks (mem-bound sweet spot), always a multiple
    # of 8 sublanes and never below 8, never (much) larger than the input.
    tm = max(_SUBLANES,
             (target_block_bytes // (_LANES * itemsize)) // _SUBLANES * _SUBLANES)
    tm = min(tm, _round_up(rows, _SUBLANES))
    # Keep >= 2 grid steps when the input is big enough so v7x's two TensorCores
    # both get work (the grid axis is "parallel").
    if rows > 2 * _MIN_SPLIT_ROWS and rows <= tm:
        tm = _round_up(pl.cdiv(rows, 2), _SUBLANES)

    padded_rows = _round_up(rows, tm)
    padded_n = padded_rows * _LANES

    flat = x.reshape(-1)
    if padded_n != n:
        # TODO(synk): handle the ragged tail in-kernel (masked store on the last
        # block with n passed via SMEM) to avoid this pad copy + final slice for
        # large non-aligned inputs.  Aligned inputs (the common case) take the
        # no-copy path below.
        flat = jnp.pad(flat, (0, padded_n - n))
    x2d = flat.reshape(padded_rows, _LANES)

    sub_arr = jnp.asarray(sub, dtype=jnp.float32).reshape(1, 1)

    grid = (padded_rows // tm,)
    out2d = pl.pallas_call(
        _scale_kernel,
        out_shape=jax.ShapeDtypeStruct((padded_rows, _LANES), orig_dtype),
        grid_spec=pltpu.PrefetchScalarGridSpec(
            num_scalar_prefetch=0,
            grid=grid,
            in_specs=[
                pl.BlockSpec(memory_space=pltpu.MemorySpace.SMEM),   # sub scalar
                pl.BlockSpec((tm, _LANES), lambda i: (i, 0)),        # x tile
            ],
            out_specs=pl.BlockSpec((tm, _LANES), lambda i: (i, 0)),
        ),
        compiler_params=pltpu.CompilerParams(
            # Elementwise => every row block is independent; lets v7x shard the
            # grid across its two TensorCores.
            dimension_semantics=("parallel",),
        ),
        # Note: input_output_aliases={1: 0} would let the output reuse x's HBM
        # buffer (halves peak footprint) when x is dead afterwards; left off here
        # since callers may still need x.
    )(sub_arr, x2d)

    out = out2d.reshape(-1)
    if padded_n != n:
        out = out[:n]
    return out.reshape(orig_shape)


if __name__ == "__main__":
    # Small shape consistent with a conv-net feature map: [B, C, H, W] = [2, 4, 16, 16]
    key = jax.random.PRNGKey(0)
    B, C, H, W = 2, 4, 16, 16
    x = jax.random.normal(key, (B, C, H, W), dtype=jnp.float32)

    # Non-trivial scale exercises the kernel; sub=1.0 exercises the fast path.
    for sub in (0.5, 1.0):
        out = jax.block_until_ready(identity_forward(x, sub=sub))
        ref = x * sub
        assert out.shape == x.shape, f"shape mismatch (sub={sub})"
        assert out.dtype == x.dtype, f"dtype mismatch (sub={sub})"
        assert jnp.allclose(out, ref, atol=1e-6, rtol=1e-6), f"mismatch vs reference (sub={sub})"

    # Ragged, non-(8x128)-aligned size exercises the padded path.
    x2 = jax.random.normal(jax.random.PRNGKey(0), (3, 5, 7), dtype=jnp.float32)
    out2 = jax.block_until_ready(identity_forward(x2, sub=2.0))
    assert out2.shape == x2.shape and out2.dtype == x2.dtype
    assert jnp.allclose(out2, x2 * 2.0, atol=1e-6, rtol=1e-6), "mismatch vs reference (ragged)"

    print("KERNEL_OK")
</pallas_src>

<mosaic_0001>
module attributes {stable_mosaic.version = 11 : i64} {
  func.func @_scale_kernel(%arg0: i32, %arg1: memref<1x1xf32, #tpu.memory_space<smem>>, %arg2: memref<16x128xf32, #tpu.memory_space<vmem>>, %arg3: memref<16x128xf32, #tpu.memory_space<vmem>>) attributes {dimension_semantics = [#tpu.dimension_semantics<parallel>], iteration_bounds = array<i64: 1>, scalar_prefetch = 0 : i64, scratch_operands = 0 : i64, tpu.core_type = #tpu.core_type<tc>, window_params = [{transform_indices = @transform_0, window_bounds = array<i64: 1, 1>}, {transform_indices = @transform_1, window_bounds = array<i64: 16, 128>}, {transform_indices = @transform_2, window_bounds = array<i64: 16, 128>}]} {
    %c0 = arith.constant 0 : index
    %c0_0 = arith.constant 0 : index
    %0 = vector.load %arg2[%c0, %c0_0] : memref<16x128xf32, #tpu.memory_space<vmem>>, vector<16x128xf32>
    %c0_1 = arith.constant 0 : index
    %c0_2 = arith.constant 0 : index
    %1 = memref.load %arg1[%c0_1, %c0_2] : memref<1x1xf32, #tpu.memory_space<smem>>
    %2 = vector.broadcast %1 : f32 to vector<16x128xf32>
    %3 = arith.mulf %0, %2 : vector<16x128xf32>
    %c0_3 = arith.constant 0 : index
    %c0_4 = arith.constant 0 : index
    %4 = vector.load %arg3[%c0_3, %c0_4] : memref<16x128xf32, #tpu.memory_space<vmem>>, vector<16x128xf32>
    tpu.vector_store %arg3[%c0_3, %c0_4], %3 {strides = array<i32>} : memref<16x128xf32, #tpu.memory_space<vmem>>, vector<16x128xf32>,
    return
  }
  func.func @transform_0(%arg0: i32) -> (i32, i32) {
    %c0_i32 = arith.constant 0 : i32
    %c0_i32_0 = arith.constant 0 : i32
    %c0_i32_1 = arith.constant 0 : i32
    return %c0_i32, %c0_i32_0 : i32, i32
  }
  func.func @transform_1(%arg0: i32) -> (i32, i32) {
    %c0_i32 = arith.constant 0 : i32
    %c0_i32_0 = arith.constant 0 : i32
    return %arg0, %c0_i32 : i32, i32
  }
  func.func @transform_2(%arg0: i32) -> (i32, i32) {
    %c0_i32 = arith.constant 0 : i32
    %c0_i32_0 = arith.constant 0 : i32
    return %arg0, %c0_i32 : i32, i32
  }
}

</mosaic_0001>

<llo_original>
// kernel: tpu_custom_call.1
$region0: #{tpu_custom_call.1}
  #allocation0 [shape = 'u32[]', space=smem, size = 0x4, offset = 0x4, fixed_abs, tag = 'smem constant byte address 0x4 - core index']
  #allocation1 [shape = 'u32[72,128]{1,0:T(1,128)}', space=vmem, size = 0x9000, scoped, tag = 'internal scratch']
  #allocation2 [shape = 'f32[1,1]{1,0:T(1,128)S(6)}', space=smem, size = 0x200, scoped, tag = 'scoped memory for tpu_custom_call.1']
  %s0 = inlined_call_operand.<no memory space> [shape: f32[1,1], index: 0, kind: input, shape index: {}]
  %s1 = inlined_call_operand.hbm [shape: f32[16,128], index: 1, kind: input, shape index: {}]
  %s2 = inlined_call_operand.hbm [shape: f32[16,128], index: 2, kind: output, shape index: {}]
  %s3 = sld [smem:[#allocation0]]
  $region22: #{tpu_custom_call.1} parent=0
    _
  %s5 = ssub.s32 1, %s3
  %s6 = scalar_select 0, %s5, %s3
  %7 = sst [smem:[#allocation2]] %s0
  $region1: #{tpu_custom_call.1} parent=0
    #allocation3 [shape = 'u8[8192]{0}', space=vmem, size = 0x2000, scoped, tag = 'input window, operand 1, single buffered']
    #allocation4 [shape = 's32[1]{0}', space=sflag, size = 0x4, scoped, tag = 'scoped memory for tpu_custom_call.1']
    #allocation5 [shape = 's32[1]{0}', space=sflag, size = 0x4, scoped, tag = 'scoped memory for tpu_custom_call.1']
    #allocation6 [shape = 'u8[8192]{0}', space=vmem, size = 0x2000, scoped, tag = 'output window, operand 0, single buffered']
    %8 = vsyncpa [#allocation4], 0
    %9 = vsyncpa [#allocation5], 0
    // Predicated region
    $region2: #{tpu_custom_call.1} parent=1 // pred_check
      _
    $region3: #{tpu_custom_call.1} parent=1 // pred_check_branch
      %11 = sbr.rel (0) target = $region5
    $region4: #{tpu_custom_call.1} parent=1 // pred_region
      _
    $region5: #{tpu_custom_call.1} parent=1 // pred_fallthru
      _
    // Predicated region
    $region6: #{tpu_custom_call.1} parent=1 // pred_check
      _
    $region7: #{tpu_custom_call.1} parent=1 // pred_check_branch
      %13 = sbr.rel (0) target = $region9
    $region8: #{tpu_custom_call.1} parent=1 // pred_region
      %15 = vsyncadd [#allocation4], 0
      %s16 = sshll.u32 %s1, 4
      %s17 = int_to_ptr.hbm [resolvable:$true] %s16
      %s18 = sshll.u32 [#allocation3], 4
      %s19 = int_to_ptr.vmem [resolvable:$true] %s18
      %24 = dma.hbm_to_vmem [thread:$0]  %s17, 256, %s19, [#allocation4], 128, 128, 8
    $region9: #{tpu_custom_call.1} parent=1 // pred_fallthru
      _
    // Predicated region
    $region10: #{tpu_custom_call.1} parent=1 // pred_check
      _
    $region11: #{tpu_custom_call.1} parent=1 // pred_check_branch
      %26 = sbr.rel (0) target = $region13
    $region12: #{tpu_custom_call.1} parent=1 // pred_region
      %28 = dma.done [#allocation4], 256
    $region13: #{tpu_custom_call.1} parent=1 // pred_fallthru
      _
    %v29 = vld [vmem:[#allocation3] sm:$0xff]
    %v30 = vld [vmem:[#allocation3 + $0x8] sm:$0xff]
    %s31 = sld [smem:[#allocation2]]
    %v32 = vstv %s31
    %v33 = vmul.f32 %v29, %v32
    %v34 = vmul.f32 %v30, %v32
    %35 = vst [vmem:[#allocation6] sm:$0xff] %v33
    %36 = vst [vmem:[#allocation6 + $0x8] sm:$0xff] %v34
    // Predicated region
    $region14: #{tpu_custom_call.1} parent=1 // pred_check
      _
    $region15: #{tpu_custom_call.1} parent=1 // pred_check_branch
      %38 = sbr.rel (0) target = $region17
    $region16: #{tpu_custom_call.1} parent=1 // pred_region
      %40 = vsyncadd [#allocation5], 0
      %s41 = sshll.u32 [#allocation6], 4
      %s42 = int_to_ptr.vmem [resolvable:$true] %s41
      %s43 = sshll.u32 %s2, 4
      %s44 = int_to_ptr.hbm [resolvable:$true] %s43
      %49 = dma.vmem_to_hbm [thread:$0]  %s42, 256, %s44, [#allocation5], 128, 128, 8
    $region17: #{tpu_custom_call.1} parent=1 // pred_fallthru
      _
    // Predicated region
    $region18: #{tpu_custom_call.1} parent=1 // pred_check
      _
    $region19: #{tpu_custom_call.1} parent=1 // pred_check_branch
      %51 = sbr.rel (0) target = $region21
    $region20: #{tpu_custom_call.1} parent=1 // pred_region
      %53 = dma.done [#allocation5], 256
    $region21: #{tpu_custom_call.1} parent=1 // pred_fallthru
      _
    %54 = vsyncpa [#allocation4], 1
    %55 = vsyncpa [#allocation5], 1

</llo_original>
